<compile_context>
chip_gen: v7x
topology: tpu7x:2x2x1
jax: 0.10.0
libtpu: 0.0.40
codegen_flags: <defaults>
</compile_context>

<pallas_src>
import functools

import jax
import jax.numpy as jnp
from jax.experimental import pallas as pl
from jax.experimental.pallas import tpu as pltpu

_BN_EPS = 1e-5        # nn.BatchNorm1d default
_L2_EPS = 1e-12       # F.normalize default


def _round_up(x, m):
    return ((x + m - 1) // m) * m


# ----------------------------------------------------------------------------
# Pallas kernel 1: fused  (M,K)bf16 @ (K,Op)bf16  + folded-BN bias + PReLU.
# ----------------------------------------------------------------------------
def _linear_bn_prelu_kernel(x_ref, w_ref, ba_ref, o_ref):
    y = jnp.dot(x_ref[...], w_ref[...], preferred_element_type=jnp.float32)
    bias = ba_ref[0:1, :]                       # (1, tn) f32
    alpha = ba_ref[1:2, :]                      # (1, tn) f32 (1.0 => identity)
    y = y + bias
    o_ref[...] = jnp.where(y > 0, y, alpha * y).astype(o_ref.dtype)


def linear_bn_prelu(x, w, ba, out_dtype):
    """x:(Mp,Kp)bf16  w:(Kp,Op)bf16  ba:(2,Op)f32 -> (Mp,Op) out_dtype.

    M and K are whole blocks (no weight re-streaming, no reduction axis);
    the grid runs only over the padded output width.
    """
    Mp, Kp = x.shape
    Kw, Op = w.shape
    assert Kw == Kp and ba.shape == (2, Op)
    tn = 256 if Op % 256 == 0 else 128          # full MXU columns on v6e/v7x
    assert Op % tn == 0
    grid = (Op // tn,)

    return pl.pallas_call(
        _linear_bn_prelu_kernel,
        out_shape=jax.ShapeDtypeStruct((Mp, Op), out_dtype),
        grid_spec=pltpu.PrefetchScalarGridSpec(
            num_scalar_prefetch=0,
            grid=grid,
            in_specs=[
                pl.BlockSpec((Mp, Kp), lambda j: (0, 0)),   # constant block -> fetched once
                pl.BlockSpec((Kp, tn), lambda j: (0, j)),
                pl.BlockSpec((2, tn), lambda j: (0, j)),
            ],
            out_specs=pl.BlockSpec((Mp, tn), lambda j: (0, j)),
        ),
        compiler_params=pltpu.CompilerParams(
            dimension_semantics=("parallel",),
            vmem_limit_bytes=48 * 1024 * 1024),
    )(x, w, ba)


# ----------------------------------------------------------------------------
# Pallas kernel 2: L2-normalize conv_encoded and concat with netvlad -> fusion.
# ----------------------------------------------------------------------------
def _fuse_l2norm_concat_kernel(nv_ref, ce_ref, o_ref):
    nv = nv_ref[...]
    ce = ce_ref[...]
    norm = jnp.sqrt(jnp.sum(ce * ce, axis=-1, keepdims=True))
    ce = ce / jnp.maximum(norm, _L2_EPS)
    d1 = nv.shape[-1]
    o_ref[:, :d1] = nv
    o_ref[:, d1:] = ce


def fuse_l2norm_concat(netvlad, conv_encoded):
    Mp, D1 = netvlad.shape
    Mp2, D2 = conv_encoded.shape
    assert Mp2 == Mp
    return pl.pallas_call(
        _fuse_l2norm_concat_kernel,
        out_shape=jax.ShapeDtypeStruct((Mp, D1 + D2), jnp.float32),
        grid_spec=pltpu.PrefetchScalarGridSpec(
            num_scalar_prefetch=0,
            grid=(1,),
            in_specs=[
                pl.BlockSpec((Mp, D1), lambda i: (0, 0)),
                pl.BlockSpec((Mp, D2), lambda i: (0, 0)),
            ],
            out_specs=pl.BlockSpec((Mp, D1 + D2), lambda i: (0, 0)),
        ),
        compiler_params=pltpu.CompilerParams(
            dimension_semantics=("arbitrary",)),
    )(netvlad, conv_encoded)


# ----------------------------------------------------------------------------
# One-time layer preparation: fold BN, pack bias+alpha, pad, cast to bf16.
# ----------------------------------------------------------------------------
def prepare_layer(raw):
    w, b = raw["w"], raw["b"]                    # torch Linear: w is (out, in)
    fout, fin = w.shape
    wmat = w.T                                   # (in, out)
    if raw["has_bn"]:
        scale = raw["gamma"] / jnp.sqrt(raw["var"] + _BN_EPS)
        shift = raw["beta"] - raw["mean"] * scale
    else:
        scale = jnp.ones((fout,), jnp.float32)
        shift = jnp.zeros((fout,), jnp.float32)
    wmat = wmat * scale[None, :]                 # fold BN scale
    bias = b * scale + shift                     # fold Linear bias + BN shift
    if raw["has_prelu"]:
        # nn.PReLU() default: single shared alpha (init 0.25), broadcast per-channel.
        alpha = jnp.full((fout,), raw["alpha"], jnp.float32)
    else:
        alpha = jnp.ones((fout,), jnp.float32)   # identity "PReLU"

    Ip = _round_up(fin, 128)
    Op = _round_up(fout, 128)
    wmat = jnp.pad(wmat, ((0, Ip - fin), (0, Op - fout))).astype(jnp.bfloat16)
    ba = jnp.stack([jnp.pad(bias, (0, Op - fout)),
                    jnp.pad(alpha, (0, Op - fout))]).astype(jnp.float32)
    return dict(w=wmat, ba=ba, out_f=fout)


# ----------------------------------------------------------------------------
# Deterministic parameter construction matching the PyTorch __init__.
# ----------------------------------------------------------------------------
def init_params(key, D, outputD):
    nums = [D, D // 2, D // 4, D // 8, outputD]
    enc_specs = [(nums[0], nums[1], True, True),
                 (nums[1], nums[2], True, True),
                 (nums[2], nums[3], True, True),
                 (nums[3], nums[4], False, False)]
    dec_specs = [(nums[4], nums[3], True, True),
                 (nums[3], nums[2], True, True),
                 (nums[2], nums[1], True, True),
                 (nums[1], nums[0], True, False)]

    def make(key, specs):
        layers = []
        for fin, fout, has_bn, has_prelu in specs:
            key, kw, kb, km, kv, kg, kbe = jax.random.split(key, 7)
            bound = 1.0 / (fin ** 0.5)
            layers.append(dict(
                w=jax.random.uniform(kw, (fout, fin), jnp.float32, -bound, bound),
                b=jax.random.uniform(kb, (fout,), jnp.float32, -bound, bound),
                gamma=1.0 + 0.1 * jax.random.normal(kg, (fout,), jnp.float32),
                beta=0.1 * jax.random.normal(kbe, (fout,), jnp.float32),
                mean=0.1 * jax.random.normal(km, (fout,), jnp.float32),
                var=1.0 + 0.1 * jax.random.uniform(kv, (fout,), jnp.float32),
                alpha=0.25,
                has_bn=has_bn, has_prelu=has_prelu))
        return key, layers

    key, enc = make(key, enc_specs)
    key, dec = make(key, dec_specs)
    return enc, dec


# ----------------------------------------------------------------------------
# Forward: fusion -> encoder -> decoder, activations kept lane/sublane padded.
# ----------------------------------------------------------------------------
def fully_auto_forward(netvlad, conv_encoded, *, enc_layers, dec_layers,
                       batch, D, outputD):
    B = batch
    Mp = _round_up(B, 16)                              # bf16 sublane packing
    nv = jnp.pad(netvlad.astype(jnp.float32), ((0, Mp - B), (0, 0)))
    ce = jnp.pad(conv_encoded.astype(jnp.float32), ((0, Mp - B), (0, 0)))

    fusion_p = fuse_l2norm_concat(nv, ce)              # (Mp, D) f32

    h = fusion_p.astype(jnp.bfloat16)
    n_enc = len(enc_layers)
    for i, lp in enumerate(enc_layers):                # encoder
        dt = jnp.float32 if i == n_enc - 1 else jnp.bfloat16
        h = linear_bn_prelu(h, lp["w"], lp["ba"], dt)
    encoded_p = h                                      # (Mp, pad(outputD)) f32

    d = h.astype(jnp.bfloat16)
    n_dec = len(dec_layers)
    for i, lp in enumerate(dec_layers):                # decoder
        dt = jnp.float32 if i == n_dec - 1 else jnp.bfloat16
        d = linear_bn_prelu(d, lp["w"], lp["ba"], dt)

    fusion = fusion_p[:B, :D]
    encoded = encoded_p[:B, :outputD]
    decoded = d[:B, :D]
    return fusion, encoded, decoded


if __name__ == "__main__":
    key = jax.random.PRNGKey(0)
    B = 8
    inputD0 = 128                 # PCA'd NetVLAD dim == convAuto encoded dim
    D = 2 * inputD0               # concatType='concat' doubles inputD
    outputD = 32

    key, k_nv, k_ce, k_p = jax.random.split(key, 4)
    netvlad = jax.random.normal(k_nv, (B, inputD0), jnp.float32)
    conv_encoded = jax.random.normal(k_ce, (B, inputD0), jnp.float32)

    enc_raw, dec_raw = init_params(k_p, D, outputD)
    enc_layers = [prepare_layer(r) for r in enc_raw]   # one-time weight prep
    dec_layers = [prepare_layer(r) for r in dec_raw]

    fwd = jax.jit(functools.partial(
        fully_auto_forward, enc_layers=enc_layers, dec_layers=dec_layers,
        batch=B, D=D, outputD=outputD))

    fusion, encoded, decoded = fwd(netvlad, conv_encoded)
    jax.block_until_ready(fusion)
    jax.block_until_ready(encoded)
    jax.block_until_ready(decoded)

    assert fusion.shape == (B, D), fusion.shape
    assert encoded.shape == (B, outputD), encoded.shape
    assert decoded.shape == (B, D), decoded.shape
    assert bool(jnp.isfinite(fusion).all())
    assert bool(jnp.isfinite(encoded).all())
    assert bool(jnp.isfinite(decoded).all())
    print("KERNEL_OK")
</pallas_src>

<mosaic_0001>
module attributes {stable_mosaic.version = 11 : i64} {
  func.func @_fuse_l2norm_concat_kernel(%arg0: i32, %arg1: memref<16x128xf32, #tpu.memory_space<vmem>>, %arg2: memref<16x128xf32, #tpu.memory_space<vmem>>, %arg3: memref<16x256xf32, #tpu.memory_space<vmem>>) attributes {dimension_semantics = [#tpu.dimension_semantics<arbitrary>], iteration_bounds = array<i64: 1>, scalar_prefetch = 0 : i64, scratch_operands = 0 : i64, tpu.core_type = #tpu.core_type<tc>, window_params = [{pipeline_mode = #tpu.pipeline_mode<synchronous>, transform_indices = @transform_0, window_bounds = array<i64: 16, 128>}, {pipeline_mode = #tpu.pipeline_mode<synchronous>, transform_indices = @transform_1, window_bounds = array<i64: 16, 128>}, {pipeline_mode = #tpu.pipeline_mode<synchronous>, transform_indices = @transform_2, window_bounds = array<i64: 16, 256>}]} {
    %c0 = arith.constant 0 : index
    %c0_0 = arith.constant 0 : index
    %0 = vector.load %arg1[%c0, %c0_0] : memref<16x128xf32, #tpu.memory_space<vmem>>, vector<16x128xf32>
    %c0_1 = arith.constant 0 : index
    %c0_2 = arith.constant 0 : index
    %1 = vector.load %arg2[%c0_1, %c0_2] : memref<16x128xf32, #tpu.memory_space<vmem>>, vector<16x128xf32>
    %2 = arith.mulf %1, %1 : vector<16x128xf32>
    %cst = arith.constant dense<0.000000e+00> : vector<16xf32>
    %3 = vector.multi_reduction <add>, %2, %cst [1] : vector<16x128xf32> to vector<16xf32>
    %4 = vector.shape_cast %3 : vector<16xf32> to vector<16x1xf32>
    %5 = math.sqrt %4 : vector<16x1xf32>
    %cst_3 = arith.constant 9.99999996E-13 : f32
    %6 = vector.broadcast %cst_3 : f32 to vector<16x1xf32>
    %7 = arith.maximumf %5, %6 : vector<16x1xf32>
    %8 = vector.broadcast %7 : vector<16x1xf32> to vector<16x128xf32>
    %9 = arith.divf %1, %8 : vector<16x128xf32>
    %c0_4 = arith.constant 0 : index
    %c0_5 = arith.constant 0 : index
    %10 = vector.load %arg3[%c0_4, %c0_5] : memref<16x256xf32, #tpu.memory_space<vmem>>, vector<16x128xf32>
    tpu.vector_store %arg3[%c0_4, %c0_5], %0 {strides = array<i32>} : memref<16x256xf32, #tpu.memory_space<vmem>>, vector<16x128xf32>,
    %c0_6 = arith.constant 0 : index
    %c128 = arith.constant 128 : index
    %11 = vector.load %arg3[%c0_6, %c128] : memref<16x256xf32, #tpu.memory_space<vmem>>, vector<16x128xf32>
    tpu.vector_store %arg3[%c0_6, %c128], %9 {strides = array<i32>} : memref<16x256xf32, #tpu.memory_space<vmem>>, vector<16x128xf32>,
    return
  }
  func.func @transform_0(%arg0: i32) -> (i32, i32) {
    %c0_i32 = arith.constant 0 : i32
    %c0_i32_0 = arith.constant 0 : i32
    %c0_i32_1 = arith.constant 0 : i32
    return %c0_i32, %c0_i32_0 : i32, i32
  }
  func.func @transform_1(%arg0: i32) -> (i32, i32) {
    %c0_i32 = arith.constant 0 : i32
    %c0_i32_0 = arith.constant 0 : i32
    %c0_i32_1 = arith.constant 0 : i32
    return %c0_i32, %c0_i32_0 : i32, i32
  }
  func.func @transform_2(%arg0: i32) -> (i32, i32) {
    %c0_i32 = arith.constant 0 : i32
    %c0_i32_0 = arith.constant 0 : i32
    %c0_i32_1 = arith.constant 0 : i32
    return %c0_i32, %c0_i32_0 : i32, i32
  }
}

module attributes {stable_mosaic.version = 11 : i64} {
  func.func @_linear_bn_prelu_kernel(%arg0: i32, %arg1: memref<16x128xbf16, #tpu.memory_space<vmem>>, %arg2: memref<128x128xbf16, #tpu.memory_space<vmem>>, %arg3: memref<2x128xf32, #tpu.memory_space<vmem>>, %arg4: memref<16x128xbf16, #tpu.memory_space<vmem>>) attributes {dimension_semantics = [#tpu.dimension_semantics<parallel>], iteration_bounds = array<i64: 1>, scalar_prefetch = 0 : i64, scratch_operands = 0 : i64, tpu.core_type = #tpu.core_type<tc>, window_params = [{pipeline_mode = #tpu.pipeline_mode<synchronous>, transform_indices = @transform_0, window_bounds = array<i64: 16, 128>}, {transform_indices = @transform_1, window_bounds = array<i64: 128, 128>}, {transform_indices = @transform_2, window_bounds = array<i64: 2, 128>}, {transform_indices = @transform_3, window_bounds = array<i64: 16, 128>}]} {
    %c0 = arith.constant 0 : index
    %c0_0 = arith.constant 0 : index
    %0 = vector.load %arg1[%c0, %c0_0] : memref<16x128xbf16, #tpu.memory_space<vmem>>, vector<16x128xbf16>
    %c0_1 = arith.constant 0 : index
    %c0_2 = arith.constant 0 : index
    %1 = vector.load %arg2[%c0_1, %c0_2] : memref<128x128xbf16, #tpu.memory_space<vmem>>, vector<128x128xbf16>
    %cst = arith.constant dense<0.000000e+00> : vector<16x128xf32>
    %2 = tpu.matmul %0, %1, %cst {dimension_numbers = #tpu.dot_dimension_numbers<[1], [0], [0], [1], [0, 0, 1, 1], [], []>} : vector<16x128xbf16>, vector<128x128xbf16>, vector<16x128xf32> -> vector<16x128xf32>
    %c0_3 = arith.constant 0 : index
    %c0_4 = arith.constant 0 : index
    %3 = vector.load %arg3[%c0_3, %c0_4] : memref<2x128xf32, #tpu.memory_space<vmem>>, vector<1x128xf32>
    %c1 = arith.constant 1 : index
    %c0_5 = arith.constant 0 : index
    %4 = vector.load %arg3[%c1, %c0_5] : memref<2x128xf32, #tpu.memory_space<vmem>>, vector<1x128xf32>
    %5 = vector.broadcast %3 : vector<1x128xf32> to vector<16x128xf32>
    %6 = arith.addf %2, %5 : vector<16x128xf32>
    %cst_6 = arith.constant 0.000000e+00 : f32
    %7 = vector.broadcast %cst_6 : f32 to vector<16x128xf32>
    %8 = arith.cmpf ogt, %6, %7 : vector<16x128xf32>
    %9 = vector.broadcast %4 : vector<1x128xf32> to vector<16x128xf32>
    %10 = arith.mulf %9, %6 : vector<16x128xf32>
    %11 = arith.select %8, %6, %10 : vector<16x128xi1>, vector<16x128xf32>
    %12 = arith.truncf %11 : vector<16x128xf32> to vector<16x128xbf16>
    %c0_7 = arith.constant 0 : index
    %c0_8 = arith.constant 0 : index
    %13 = vector.load %arg4[%c0_7, %c0_8] : memref<16x128xbf16, #tpu.memory_space<vmem>>, vector<16x128xbf16>
    tpu.vector_store %arg4[%c0_7, %c0_8], %12 {strides = array<i32>} : memref<16x128xbf16, #tpu.memory_space<vmem>>, vector<16x128xbf16>,
    return
  }
  func.func @transform_0(%arg0: i32) -> (i32, i32) {
    %c0_i32 = arith.constant 0 : i32
    %c0_i32_0 = arith.constant 0 : i32
    %c0_i32_1 = arith.constant 0 : i32
    return %c0_i32, %c0_i32_0 : i32, i32
  }
  func.func @transform_1(%arg0: i32) -> (i32, i32) {
    %c0_i32 = arith.constant 0 : i32
    %c0_i32_0 = arith.constant 0 : i32
    return %c0_i32, %arg0 : i32, i32
  }
  func.func @transform_2(%arg0: i32) -> (i32, i32) {
    %c0_i32 = arith.constant 0 : i32
    %c0_i32_0 = arith.constant 0 : i32
    return %c0_i32, %arg0 : i32, i32
  }
  func.func @transform_3(%arg0: i32) -> (i32, i32) {
    %c0_i32 = arith.constant 0 : i32
    %c0_i32_0 = arith.constant 0 : i32
    return %c0_i32, %arg0 : i32, i32
  }
}

module attributes {stable_mosaic.version = 11 : i64} {
  func.func @_linear_bn_prelu_kernel(%arg0: i32, %arg1: memref<16x256xbf16, #tpu.memory_space<vmem>>, %arg2: memref<256x128xbf16, #tpu.memory_space<vmem>>, %arg3: memref<2x128xf32, #tpu.memory_space<vmem>>, %arg4: memref<16x128xbf16, #tpu.memory_space<vmem>>) attributes {dimension_semantics = [#tpu.dimension_semantics<parallel>], iteration_bounds = array<i64: 1>, scalar_prefetch = 0 : i64, scratch_operands = 0 : i64, tpu.core_type = #tpu.core_type<tc>, window_params = [{pipeline_mode = #tpu.pipeline_mode<synchronous>, transform_indices = @transform_0, window_bounds = array<i64: 16, 256>}, {transform_indices = @transform_1, window_bounds = array<i64: 256, 128>}, {transform_indices = @transform_2, window_bounds = array<i64: 2, 128>}, {transform_indices = @transform_3, window_bounds = array<i64: 16, 128>}]} {
    %c0 = arith.constant 0 : index
    %c0_0 = arith.constant 0 : index
    %0 = vector.load %arg1[%c0, %c0_0] : memref<16x256xbf16, #tpu.memory_space<vmem>>, vector<16x256xbf16>
    %c0_1 = arith.constant 0 : index
    %c0_2 = arith.constant 0 : index
    %1 = vector.load %arg2[%c0_1, %c0_2] : memref<256x128xbf16, #tpu.memory_space<vmem>>, vector<256x128xbf16>
    %cst = arith.constant dense<0.000000e+00> : vector<16x128xf32>
    %2 = tpu.matmul %0, %1, %cst {dimension_numbers = #tpu.dot_dimension_numbers<[1], [0], [0], [1], [0, 0, 1, 1], [], []>} : vector<16x256xbf16>, vector<256x128xbf16>, vector<16x128xf32> -> vector<16x128xf32>
    %c0_3 = arith.constant 0 : index
    %c0_4 = arith.constant 0 : index
    %3 = vector.load %arg3[%c0_3, %c0_4] : memref<2x128xf32, #tpu.memory_space<vmem>>, vector<1x128xf32>
    %c1 = arith.constant 1 : index
    %c0_5 = arith.constant 0 : index
    %4 = vector.load %arg3[%c1, %c0_5] : memref<2x128xf32, #tpu.memory_space<vmem>>, vector<1x128xf32>
    %5 = vector.broadcast %3 : vector<1x128xf32> to vector<16x128xf32>
    %6 = arith.addf %2, %5 : vector<16x128xf32>
    %cst_6 = arith.constant 0.000000e+00 : f32
    %7 = vector.broadcast %cst_6 : f32 to vector<16x128xf32>
    %8 = arith.cmpf ogt, %6, %7 : vector<16x128xf32>
    %9 = vector.broadcast %4 : vector<1x128xf32> to vector<16x128xf32>
    %10 = arith.mulf %9, %6 : vector<16x128xf32>
    %11 = arith.select %8, %6, %10 : vector<16x128xi1>, vector<16x128xf32>
    %12 = arith.truncf %11 : vector<16x128xf32> to vector<16x128xbf16>
    %c0_7 = arith.constant 0 : index
    %c0_8 = arith.constant 0 : index
    %13 = vector.load %arg4[%c0_7, %c0_8] : memref<16x128xbf16, #tpu.memory_space<vmem>>, vector<16x128xbf16>
    tpu.vector_store %arg4[%c0_7, %c0_8], %12 {strides = array<i32>} : memref<16x128xbf16, #tpu.memory_space<vmem>>, vector<16x128xbf16>,
    return
  }
  func.func @transform_0(%arg0: i32) -> (i32, i32) {
    %c0_i32 = arith.constant 0 : i32
    %c0_i32_0 = arith.constant 0 : i32
    %c0_i32_1 = arith.constant 0 : i32
    return %c0_i32, %c0_i32_0 : i32, i32
  }
  func.func @transform_1(%arg0: i32) -> (i32, i32) {
    %c0_i32 = arith.constant 0 : i32
    %c0_i32_0 = arith.constant 0 : i32
    return %c0_i32, %arg0 : i32, i32
  }
  func.func @transform_2(%arg0: i32) -> (i32, i32) {
    %c0_i32 = arith.constant 0 : i32
    %c0_i32_0 = arith.constant 0 : i32
    return %c0_i32, %arg0 : i32, i32
  }
  func.func @transform_3(%arg0: i32) -> (i32, i32) {
    %c0_i32 = arith.constant 0 : i32
    %c0_i32_0 = arith.constant 0 : i32
    return %c0_i32, %arg0 : i32, i32
  }
}

module attributes {stable_mosaic.version = 11 : i64} {
  func.func @_linear_bn_prelu_kernel(%arg0: i32, %arg1: memref<16x128xbf16, #tpu.memory_space<vmem>>, %arg2: memref<128x128xbf16, #tpu.memory_space<vmem>>, %arg3: memref<2x128xf32, #tpu.memory_space<vmem>>, %arg4: memref<16x128xf32, #tpu.memory_space<vmem>>) attributes {dimension_semantics = [#tpu.dimension_semantics<parallel>], iteration_bounds = array<i64: 1>, scalar_prefetch = 0 : i64, scratch_operands = 0 : i64, tpu.core_type = #tpu.core_type<tc>, window_params = [{pipeline_mode = #tpu.pipeline_mode<synchronous>, transform_indices = @transform_0, window_bounds = array<i64: 16, 128>}, {transform_indices = @transform_1, window_bounds = array<i64: 128, 128>}, {transform_indices = @transform_2, window_bounds = array<i64: 2, 128>}, {transform_indices = @transform_3, window_bounds = array<i64: 16, 128>}]} {
    %c0 = arith.constant 0 : index
    %c0_0 = arith.constant 0 : index
    %0 = vector.load %arg1[%c0, %c0_0] : memref<16x128xbf16, #tpu.memory_space<vmem>>, vector<16x128xbf16>
    %c0_1 = arith.constant 0 : index
    %c0_2 = arith.constant 0 : index
    %1 = vector.load %arg2[%c0_1, %c0_2] : memref<128x128xbf16, #tpu.memory_space<vmem>>, vector<128x128xbf16>
    %cst = arith.constant dense<0.000000e+00> : vector<16x128xf32>
    %2 = tpu.matmul %0, %1, %cst {dimension_numbers = #tpu.dot_dimension_numbers<[1], [0], [0], [1], [0, 0, 1, 1], [], []>} : vector<16x128xbf16>, vector<128x128xbf16>, vector<16x128xf32> -> vector<16x128xf32>
    %c0_3 = arith.constant 0 : index
    %c0_4 = arith.constant 0 : index
    %3 = vector.load %arg3[%c0_3, %c0_4] : memref<2x128xf32, #tpu.memory_space<vmem>>, vector<1x128xf32>
    %c1 = arith.constant 1 : index
    %c0_5 = arith.constant 0 : index
    %4 = vector.load %arg3[%c1, %c0_5] : memref<2x128xf32, #tpu.memory_space<vmem>>, vector<1x128xf32>
    %5 = vector.broadcast %3 : vector<1x128xf32> to vector<16x128xf32>
    %6 = arith.addf %2, %5 : vector<16x128xf32>
    %cst_6 = arith.constant 0.000000e+00 : f32
    %7 = vector.broadcast %cst_6 : f32 to vector<16x128xf32>
    %8 = arith.cmpf ogt, %6, %7 : vector<16x128xf32>
    %9 = vector.broadcast %4 : vector<1x128xf32> to vector<16x128xf32>
    %10 = arith.mulf %9, %6 : vector<16x128xf32>
    %11 = arith.select %8, %6, %10 : vector<16x128xi1>, vector<16x128xf32>
    %c0_7 = arith.constant 0 : index
    %c0_8 = arith.constant 0 : index
    %12 = vector.load %arg4[%c0_7, %c0_8] : memref<16x128xf32, #tpu.memory_space<vmem>>, vector<16x128xf32>
    tpu.vector_store %arg4[%c0_7, %c0_8], %11 {strides = array<i32>} : memref<16x128xf32, #tpu.memory_space<vmem>>, vector<16x128xf32>,
    return
  }
  func.func @transform_0(%arg0: i32) -> (i32, i32) {
    %c0_i32 = arith.constant 0 : i32
    %c0_i32_0 = arith.constant 0 : i32
    %c0_i32_1 = arith.constant 0 : i32
    return %c0_i32, %c0_i32_0 : i32, i32
  }
  func.func @transform_1(%arg0: i32) -> (i32, i32) {
    %c0_i32 = arith.constant 0 : i32
    %c0_i32_0 = arith.constant 0 : i32
    return %c0_i32, %arg0 : i32, i32
  }
  func.func @transform_2(%arg0: i32) -> (i32, i32) {
    %c0_i32 = arith.constant 0 : i32
    %c0_i32_0 = arith.constant 0 : i32
    return %c0_i32, %arg0 : i32, i32
  }
  func.func @transform_3(%arg0: i32) -> (i32, i32) {
    %c0_i32 = arith.constant 0 : i32
    %c0_i32_0 = arith.constant 0 : i32
    return %c0_i32, %arg0 : i32, i32
  }
}

module attributes {stable_mosaic.version = 11 : i64} {
  func.func @_linear_bn_prelu_kernel(%arg0: i32, %arg1: memref<16x128xbf16, #tpu.memory_space<vmem>>, %arg2: memref<128x256xbf16, #tpu.memory_space<vmem>>, %arg3: memref<2x256xf32, #tpu.memory_space<vmem>>, %arg4: memref<16x256xf32, #tpu.memory_space<vmem>>) attributes {dimension_semantics = [#tpu.dimension_semantics<parallel>], iteration_bounds = array<i64: 1>, scalar_prefetch = 0 : i64, scratch_operands = 0 : i64, tpu.core_type = #tpu.core_type<tc>, window_params = [{pipeline_mode = #tpu.pipeline_mode<synchronous>, transform_indices = @transform_0, window_bounds = array<i64: 16, 128>}, {transform_indices = @transform_1, window_bounds = array<i64: 128, 256>}, {transform_indices = @transform_2, window_bounds = array<i64: 2, 256>}, {transform_indices = @transform_3, window_bounds = array<i64: 16, 256>}]} {
    %c0 = arith.constant 0 : index
    %c0_0 = arith.constant 0 : index
    %0 = vector.load %arg1[%c0, %c0_0] : memref<16x128xbf16, #tpu.memory_space<vmem>>, vector<16x128xbf16>
    %c0_1 = arith.constant 0 : index
    %c0_2 = arith.constant 0 : index
    %1 = vector.load %arg2[%c0_1, %c0_2] : memref<128x256xbf16, #tpu.memory_space<vmem>>, vector<128x256xbf16>
    %cst = arith.constant dense<0.000000e+00> : vector<16x256xf32>
    %2 = tpu.matmul %0, %1, %cst {dimension_numbers = #tpu.dot_dimension_numbers<[1], [0], [0], [1], [0, 0, 1, 1], [], []>} : vector<16x128xbf16>, vector<128x256xbf16>, vector<16x256xf32> -> vector<16x256xf32>
    %c0_3 = arith.constant 0 : index
    %c0_4 = arith.constant 0 : index
    %3 = vector.load %arg3[%c0_3, %c0_4] : memref<2x256xf32, #tpu.memory_space<vmem>>, vector<1x256xf32>
    %c1 = arith.constant 1 : index
    %c0_5 = arith.constant 0 : index
    %4 = vector.load %arg3[%c1, %c0_5] : memref<2x256xf32, #tpu.memory_space<vmem>>, vector<1x256xf32>
    %5 = vector.broadcast %3 : vector<1x256xf32> to vector<16x256xf32>
    %6 = arith.addf %2, %5 : vector<16x256xf32>
    %cst_6 = arith.constant 0.000000e+00 : f32
    %7 = vector.broadcast %cst_6 : f32 to vector<16x256xf32>
    %8 = arith.cmpf ogt, %6, %7 : vector<16x256xf32>
    %9 = vector.broadcast %4 : vector<1x256xf32> to vector<16x256xf32>
    %10 = arith.mulf %9, %6 : vector<16x256xf32>
    %11 = arith.select %8, %6, %10 : vector<16x256xi1>, vector<16x256xf32>
    %c0_7 = arith.constant 0 : index
    %c0_8 = arith.constant 0 : index
    %12 = vector.load %arg4[%c0_7, %c0_8] : memref<16x256xf32, #tpu.memory_space<vmem>>, vector<16x256xf32>
    tpu.vector_store %arg4[%c0_7, %c0_8], %11 {strides = array<i32>} : memref<16x256xf32, #tpu.memory_space<vmem>>, vector<16x256xf32>,
    return
  }
  func.func @transform_0(%arg0: i32) -> (i32, i32) {
    %c0_i32 = arith.constant 0 : i32
    %c0_i32_0 = arith.constant 0 : i32
    %c0_i32_1 = arith.constant 0 : i32
    return %c0_i32, %c0_i32_0 : i32, i32
  }
  func.func @transform_1(%arg0: i32) -> (i32, i32) {
    %c0_i32 = arith.constant 0 : i32
    %c0_i32_0 = arith.constant 0 : i32
    return %c0_i32, %arg0 : i32, i32
  }
  func.func @transform_2(%arg0: i32) -> (i32, i32) {
    %c0_i32 = arith.constant 0 : i32
    %c0_i32_0 = arith.constant 0 : i32
    return %c0_i32, %arg0 : i32, i32
  }
  func.func @transform_3(%arg0: i32) -> (i32, i32) {
    %c0_i32 = arith.constant 0 : i32
    %c0_i32_0 = arith.constant 0 : i32
    return %c0_i32, %arg0 : i32, i32
  }
}

</mosaic_0001>

<llo_original>
// kernel: fully_auto_forward.9
$region0: #{fully_auto_forward.9}
  #allocation0 [shape = 'u32[]', space=smem, size = 0x4, offset = 0x4, fixed_abs, tag = 'smem constant byte address 0x4 - core index']
  #allocation1 [shape = 'u32[144,128]{1,0:T(1,128)}', space=vmem, size = 0x12000, scoped, tag = 'internal scratch']
  %s0 = inlined_call_operand.vmem [shape: f32[16,128], index: 0, kind: input, shape index: {}]
  %s1 = inlined_call_operand.vmem [shape: f32[16,128], index: 1, kind: input, shape index: {}]
  %s2 = inlined_call_operand.vmem [shape: f32[16,256], index: 2, kind: output, shape index: {}]
  %s3 = sld [smem:[#allocation0]]
  $region18: #{fully_auto_forward.9} parent=0
    _
  %s5 = ssub.s32 1, %s3
  %s6 = scalar_select 0, %s5, %s3
  // Predicated region
  $region2: #{fully_auto_forward.9} parent=0 // pred_check
    _
  $region3: #{fully_auto_forward.9} parent=0 // pred_check_branch
    %8 = sbr.rel (0) target = $region5
  $region4: #{fully_auto_forward.9} parent=0 // pred_region
    _
  $region5: #{fully_auto_forward.9} parent=0 // pred_fallthru
    _
  // Predicated region
  $region6: #{fully_auto_forward.9} parent=0 // pred_check
    _
  $region7: #{fully_auto_forward.9} parent=0 // pred_check_branch
    %10 = sbr.rel (0) target = $region9
  $region8: #{fully_auto_forward.9} parent=0 // pred_region
    _
  $region9: #{fully_auto_forward.9} parent=0 // pred_fallthru
    _
  %v11 = vld [vmem:[%s0] sm:$0xff]
  %v12 = vld [vmem:[%s0 + $0x8] sm:$0xff]
  %v13 = vld [vmem:[%s1] sm:$0xff]
  %v14 = vld [vmem:[%s1 + $0x8] sm:$0xff]
  %v15 = vmul.f32 %v13, %v13
  %v16 = vmul.f32 %v14, %v14
  %17 = vadd.xlane.f32.xlu0 %v15
  %v18 = vpop.xlane.xlu0 %17
  %19 = vadd.xlane.f32.xlu0 %v16
  %v20 = vpop.xlane.xlu0 %19
  %v21 = vrsqrt.pop %v18
  %v22 = vmul.f32 %v18, %v21
  %vm23 = vcmp.eq.f32.partialorder %v18, inf
  %v24 = vsel %vm23, %v18, %v22
  %vm25 = vcmp.eq.f32.partialorder %v18, 0.0
  %v26 = vand.u32 %v18, 2147483648
  %v27 = vsel %vm25, %v26, %v24
  %v28 = vrsqrt.pop %v20
  %v29 = vmul.f32 %v20, %v28
  %vm30 = vcmp.eq.f32.partialorder %v20, inf
  %v31 = vsel %vm30, %v20, %v29
  %vm32 = vcmp.eq.f32.partialorder %v20, 0.0
  %v33 = vand.u32 %v20, 2147483648
  %v34 = vsel %vm32, %v33, %v31
  %v35 = vmax.f32 %v27, 1e-12
  %v36 = vmax.f32 %v34, 1e-12
  %v37 = vrcp.pop %v35
  %v38 = vmul.f32 %v13, %v37
  %v39 = vrcp.pop %v36
  %v40 = vmul.f32 %v14, %v39
  %41 = vst [vmem:[%s2] sm:$0xff] %v11
  %42 = vst [vmem:[%s2 + $0x10] sm:$0xff] %v12
  %43 = vst [vmem:[%s2 + $0x8] sm:$0xff] %v38
  %44 = vst [vmem:[%s2 + $0x18] sm:$0xff] %v40
  // Predicated region
  $region10: #{fully_auto_forward.9} parent=0 // pred_check
    _
  $region11: #{fully_auto_forward.9} parent=0 // pred_check_branch
    %46 = sbr.rel (0) target = $region13
  $region12: #{fully_auto_forward.9} parent=0 // pred_region
    _
  $region13: #{fully_auto_forward.9} parent=0 // pred_fallthru
    _
  // Predicated region
  $region14: #{fully_auto_forward.9} parent=0 // pred_check
    _
  $region15: #{fully_auto_forward.9} parent=0 // pred_check_branch
    %48 = sbr.rel (0) target = $region17
  $region16: #{fully_auto_forward.9} parent=0 // pred_region
    _
  $region17: #{fully_auto_forward.9} parent=0 // pred_fallthru
    _

// kernel: fully_auto_forward.11
$region0: #{fully_auto_forward.11}
  #allocation0 [shape = 'u32[]', space=smem, size = 0x4, offset = 0x4, fixed_abs, tag = 'smem constant byte address 0x4 - core index']
  #allocation1 [shape = 'u32[144,128]{1,0:T(1,128)}', space=vmem, size = 0x12000, scoped, tag = 'internal scratch']
  %s0 = inlined_call_operand.vmem [shape: bf16[16,128], index: 0, kind: input, shape index: {}]
  %s1 = inlined_call_operand.vmem [shape: bf16[128,128], index: 1, kind: input, shape index: {}]
  %s2 = inlined_call_operand.vmem [shape: f32[2,128], index: 2, kind: input, shape index: {}]
  %s3 = inlined_call_operand.vmem [shape: bf16[16,128], index: 3, kind: output, shape index: {}]
  %s4 = sld [smem:[#allocation0]]
  $region22: #{fully_auto_forward.11} parent=0
    _
  %s6 = ssub.s32 1, %s4
  %s7 = scalar_select 0, %s6, %s4
  // Predicated region
  $region2: #{fully_auto_forward.11} parent=0 // pred_check
    _
  $region3: #{fully_auto_forward.11} parent=0 // pred_check_branch
    %9 = sbr.rel (0) target = $region5
  $region4: #{fully_auto_forward.11} parent=0 // pred_region
    _
  $region5: #{fully_auto_forward.11} parent=0 // pred_fallthru
    _
  // Predicated region
  $region6: #{fully_auto_forward.11} parent=0 // pred_check
    _
  $region7: #{fully_auto_forward.11} parent=0 // pred_check_branch
    %11 = sbr.rel (0) target = $region9
  $region8: #{fully_auto_forward.11} parent=0 // pred_region
    _
  $region9: #{fully_auto_forward.11} parent=0 // pred_fallthru
    _
  // Predicated region
  $region10: #{fully_auto_forward.11} parent=0 // pred_check
    _
  $region11: #{fully_auto_forward.11} parent=0 // pred_check_branch
    %13 = sbr.rel (0) target = $region13
  $region12: #{fully_auto_forward.11} parent=0 // pred_region
    _
  $region13: #{fully_auto_forward.11} parent=0 // pred_fallthru
    _
  %v15 = vld [vmem:[%s0] sm:$0xf]
  %v16 = vld [vmem:[%s0 + $0x4] sm:$0xf]
  %v17 = vld [vmem:[%s1] sm:$0xf]
  %v18 = vld [vmem:[%s1 + $0x4] sm:$0xf]
  %v19 = vld [vmem:[%s1 + $0x8] sm:$0xf]
  %v20 = vld [vmem:[%s1 + $0xc] sm:$0xf]
  %v21 = vld [vmem:[%s1 + $0x10] sm:$0xf]
  %v22 = vld [vmem:[%s1 + $0x14] sm:$0xf]
  %v23 = vld [vmem:[%s1 + $0x18] sm:$0xf]
  %v24 = vld [vmem:[%s1 + $0x1c] sm:$0xf]
  %v25 = vld [vmem:[%s1 + $0x20] sm:$0xf]
  %v26 = vld [vmem:[%s1 + $0x24] sm:$0xf]
  %v27 = vld [vmem:[%s1 + $0x28] sm:$0xf]
  %v28 = vld [vmem:[%s1 + $0x2c] sm:$0xf]
  %v29 = vld [vmem:[%s1 + $0x30] sm:$0xf]
  %v30 = vld [vmem:[%s1 + $0x34] sm:$0xf]
  %v31 = vld [vmem:[%s1 + $0x38] sm:$0xf]
  %v32 = vld [vmem:[%s1 + $0x3c] sm:$0xf]
  %v33 = vld [vmem:[%s2] sm:$0x1]
  %v34 = vld [vmem:[%s2 + $0x1] sm:$0x1]
  %v35 = vlaneseq
  %v36 = vshrl.u32 %v35, 7
  %v37 = vsub.s32 0, %v36
  %v38 = vrot.slane %v33, %v37
  %v41 = vunpack.c.l.b16 %v15
  %v42 = vunpack.c.l.b16 %v16
  %v43 = vpack.c.b16 %v42, %v41
  %v61 = vunpack.c.l.b16 %v17
  %v62 = vunpack.c.l.b16 %v18
  %v63 = vunpack.c.l.b16 %v19
  %v64 = vunpack.c.l.b16 %v20
  %v65 = vunpack.c.l.b16 %v21
  %v66 = vunpack.c.l.b16 %v22
  %v67 = vunpack.c.l.b16 %v23
  %v68 = vunpack.c.l.b16 %v24
  %v69 = vunpack.c.l.b16 %v25
  %v70 = vunpack.c.l.b16 %v26
  %v71 = vunpack.c.l.b16 %v27
  %v72 = vunpack.c.l.b16 %v28
  %v73 = vunpack.c.l.b16 %v29
  %v74 = vunpack.c.l.b16 %v30
  %v75 = vunpack.c.l.b16 %v31
  %v76 = vunpack.c.l.b16 %v32
  %v77 = vpack.c.b16 %v62, %v61
  %v78 = vpack.c.b16 %v64, %v63
  %v79 = vpack.c.b16 %v66, %v65
  %v80 = vpack.c.b16 %v68, %v67
  %v81 = vpack.c.b16 %v70, %v69
  %v82 = vpack.c.b16 %v72, %v71
  %v83 = vpack.c.b16 %v74, %v73
  %v84 = vpack.c.b16 %v76, %v75
  %93 = vmatprep.subr.bf16.mxu0 0
  %94 = vmatpush1.bf16.msra.mxu0 %v77
  %95 = vmatprep.subr.bf16.mxu0 0
  %96 = vmatpush1.bf16.msra.mxu0 %v78
  %97 = vmatprep.subr.bf16.mxu0 0
  %98 = vmatpush1.bf16.msra.mxu0 %v79
  %99 = vmatprep.subr.bf16.mxu0 0
  %100 = vmatpush1.bf16.msra.mxu0 %v80
  %101 = vmatprep.subr.bf16.mxu0 0
  %102 = vmatpush1.bf16.msra.mxu0 %v81
  %103 = vmatprep.subr.bf16.mxu0 0
  %104 = vmatpush1.bf16.msra.mxu0 %v82
  %105 = vmatprep.subr.bf16.mxu0 0
  %106 = vmatpush1.bf16.msra.mxu0 %v83
  %107 = vmatprep.subr.bf16.mxu0 0
  %108 = vmatpush1.bf16.msra.mxu0 %v84
  %109 = vmatprep.subr.bf16.mxu0 0
  %110 = vmatpush1.bf16.msra.mxu0 0
  %111 = vmatprep.subr.bf16.mxu0 0
  %112 = vmatpush1.bf16.msra.mxu0 0
  %113 = vmatprep.subr.bf16.mxu0 0
  %114 = vmatpush1.bf16.msra.mxu0 0
  %115 = vmatprep.subr.bf16.mxu0 0
  %116 = vmatpush1.bf16.msra.mxu0 0
  %117 = vmatprep.subr.bf16.mxu0 0
  %118 = vmatpush1.bf16.msra.mxu0 0
  %119 = vmatprep.subr.bf16.mxu0 0
  %120 = vmatpush1.bf16.msra.mxu0 0
  %121 = vmatprep.subr.bf16.mxu0 0
  %122 = vmatpush1.bf16.msra.mxu0 0
  %123 = vmatprep.subr.bf16.mxu0 0
  %124 = vmatpush1.bf16.msra.mxu0 0
  %125 = vmatprep.mubr.bf16.mxu0 0
  %126 = vmatmul.mubr.bf16.gmra.mrb[0].mxu0 %v43
  %v127 = vpop.f32.mrb[0].mxu0
  %v128 = vadd.f32 %v38, %v127
  %v129 = vpop.f32.mrb[0].mxu0
  %v130 = vpop.f32.mrb[0].mxu0
  %v131 = vadd.f32 %v38, %v130
  %v132 = vpop.f32.mrb[0].mxu0
  %133 = vdwg.mxu0
  %vm134 = vcmp.gt.f32.partialorder %v128, 0.0
  %vm135 = vcmp.gt.f32.partialorder %v131, 0.0
  %v136 = vlaneseq
  %v137 = vshrl.u32 %v136, 7
  %v138 = vsub.s32 0, %v137
  %v139 = vrot.slane %v34, %v138
  %v140 = vmul.f32 %v139, %v128
  %v141 = vmul.f32 %v139, %v131
  %v142 = vsel %vm134, %v128, %v140
  %v143 = vsel %vm135, %v131, %v141
  %v144 = vpack.c.bf16 %v143, %v142
  %v146 = vunpack.c.l.b16 %v144
  %v147 = vunpack.c.h.b16 %v144
  %v148 = vpack.c.b16 %v146, %v146
  %v149 = vpack.c.b16 %v147, %v147
  %152 = vst [vmem:[%s3] sm:$0xf] %v148
  %153 = vst [vmem:[%s3 + $0x4] sm:$0xf] %v149
  // Predicated region
  $region14: #{fully_auto_forward.11} parent=0 // pred_check
    _
  $region15: #{fully_auto_forward.11} parent=0 // pred_check_branch
    %155 = sbr.rel (0) target = $region17
  $region16: #{fully_auto_forward.11} parent=0 // pred_region
    _
  $region17: #{fully_auto_forward.11} parent=0 // pred_fallthru
    _
  // Predicated region
  $region18: #{fully_auto_forward.11} parent=0 // pred_check
    _
  $region19: #{fully_auto_forward.11} parent=0 // pred_check_branch
    %157 = sbr.rel (0) target = $region21
  $region20: #{fully_auto_forward.11} parent=0 // pred_region
    _
  $region21: #{fully_auto_forward.11} parent=0 // pred_fallthru
    _

// kernel: fully_auto_forward.10
$region0: #{fully_auto_forward.10}
  #allocation0 [shape = 'u32[]', space=smem, size = 0x4, offset = 0x4, fixed_abs, tag = 'smem constant byte address 0x4 - core index']
  #allocation1 [shape = 'u32[144,128]{1,0:T(1,128)}', space=vmem, size = 0x12000, scoped, tag = 'internal scratch']
  %s0 = inlined_call_operand.vmem [shape: bf16[16,256], index: 0, kind: input, shape index: {}]
  %s1 = inlined_call_operand.vmem [shape: bf16[256,128], index: 1, kind: input, shape index: {}]
  %s2 = inlined_call_operand.vmem [shape: f32[2,128], index: 2, kind: input, shape index: {}]
  %s3 = inlined_call_operand.vmem [shape: bf16[16,128], index: 3, kind: output, shape index: {}]
  %s4 = sld [smem:[#allocation0]]
  $region22: #{fully_auto_forward.10} parent=0
    _
  %s6 = ssub.s32 1, %s4
  %s7 = scalar_select 0, %s6, %s4
  // Predicated region
  $region2: #{fully_auto_forward.10} parent=0 // pred_check
    _
  $region3: #{fully_auto_forward.10} parent=0 // pred_check_branch
    %9 = sbr.rel (0) target = $region5
  $region4: #{fully_auto_forward.10} parent=0 // pred_region
    _
  $region5: #{fully_auto_forward.10} parent=0 // pred_fallthru
    _
  // Predicated region
  $region6: #{fully_auto_forward.10} parent=0 // pred_check
    _
  $region7: #{fully_auto_forward.10} parent=0 // pred_check_branch
    %11 = sbr.rel (0) target = $region9
  $region8: #{fully_auto_forward.10} parent=0 // pred_region
    _
  $region9: #{fully_auto_forward.10} parent=0 // pred_fallthru
    _
  // Predicated region
  $region10: #{fully_auto_forward.10} parent=0 // pred_check
    _
  $region11: #{fully_auto_forward.10} parent=0 // pred_check_branch
    %13 = sbr.rel (0) target = $region13
  $region12: #{fully_auto_forward.10} parent=0 // pred_region
    _
  $region13: #{fully_auto_forward.10} parent=0 // pred_fallthru
    _
  %v15 = vld [vmem:[%s0] sm:$0xff]
  %v16 = vld [vmem:[%s0 + $0x8] sm:$0xff]
  %v17 = vld [vmem:[%s1] sm:$0xf]
  %v18 = vld [vmem:[%s1 + $0x4] sm:$0xf]
  %v19 = vld [vmem:[%s1 + $0x8] sm:$0xf]
  %v20 = vld [vmem:[%s1 + $0xc] sm:$0xf]
  %v21 = vld [vmem:[%s1 + $0x10] sm:$0xf]
  %v22 = vld [vmem:[%s1 + $0x14] sm:$0xf]
  %v23 = vld [vmem:[%s1 + $0x18] sm:$0xf]
  %v24 = vld [vmem:[%s1 + $0x1c] sm:$0xf]
  %v25 = vld [vmem:[%s1 + $0x20] sm:$0xf]
  %v26 = vld [vmem:[%s1 + $0x24] sm:$0xf]
  %v27 = vld [vmem:[%s1 + $0x28] sm:$0xf]
  %v28 = vld [vmem:[%s1 + $0x2c] sm:$0xf]
  %v29 = vld [vmem:[%s1 + $0x30] sm:$0xf]
  %v30 = vld [vmem:[%s1 + $0x34] sm:$0xf]
  %v31 = vld [vmem:[%s1 + $0x38] sm:$0xf]
  %v32 = vld [vmem:[%s1 + $0x3c] sm:$0xf]
  %v33 = vld [vmem:[%s1 + $0x40] sm:$0xf]
  %v34 = vld [vmem:[%s1 + $0x44] sm:$0xf]
  %v35 = vld [vmem:[%s1 + $0x48] sm:$0xf]
  %v36 = vld [vmem:[%s1 + $0x4c] sm:$0xf]
  %v37 = vld [vmem:[%s1 + $0x50] sm:$0xf]
  %v38 = vld [vmem:[%s1 + $0x54] sm:$0xf]
  %v39 = vld [vmem:[%s1 + $0x58] sm:$0xf]
  %v40 = vld [vmem:[%s1 + $0x5c] sm:$0xf]
  %v41 = vld [vmem:[%s1 + $0x60] sm:$0xf]
  %v42 = vld [vmem:[%s1 + $0x64] sm:$0xf]
  %v43 = vld [vmem:[%s1 + $0x68] sm:$0xf]
  %v44 = vld [vmem:[%s1 + $0x6c] sm:$0xf]
  %v45 = vld [vmem:[%s1 + $0x70] sm:$0xf]
  %v46 = vld [vmem:[%s1 + $0x74] sm:$0xf]
  %v47 = vld [vmem:[%s1 + $0x78] sm:$0xf]
  %v48 = vld [vmem:[%s1 + $0x7c] sm:$0xf]
  %v49 = vld [vmem:[%s2] sm:$0x1]
  %v50 = vld [vmem:[%s2 + $0x1] sm:$0x1]
  %v51 = vlaneseq
  %v52 = vshrl.u32 %v51, 7
  %v53 = vsub.s32 0, %v52
  %v54 = vrot.slane %v49, %v53
  %v57 = vunpack.c.l.b16 %v15
  %v58 = vunpack.c.h.b16 %v15
  %v59 = vunpack.c.l.b16 %v16
  %v60 = vunpack.c.h.b16 %v16
  %v61 = vpack.c.b16 %v59, %v57
  %v62 = vpack.c.b16 %v60, %v58
  %v97 = vunpack.c.l.b16 %v17
  %v98 = vunpack.c.l.b16 %v18
  %v99 = vunpack.c.l.b16 %v19
  %v100 = vunpack.c.l.b16 %v20
  %v101 = vunpack.c.l.b16 %v21
  %v102 = vunpack.c.l.b16 %v22
  %v103 = vunpack.c.l.b16 %v23
  %v104 = vunpack.c.l.b16 %v24
  %v105 = vunpack.c.l.b16 %v25
  %v106 = vunpack.c.l.b16 %v26
  %v107 = vunpack.c.l.b16 %v27
  %v108 = vunpack.c.l.b16 %v28
  %v109 = vunpack.c.l.b16 %v29
  %v110 = vunpack.c.l.b16 %v30
  %v111 = vunpack.c.l.b16 %v31
  %v112 = vunpack.c.l.b16 %v32
  %v113 = vunpack.c.l.b16 %v33
  %v114 = vunpack.c.l.b16 %v34
  %v115 = vunpack.c.l.b16 %v35
  %v116 = vunpack.c.l.b16 %v36
  %v117 = vunpack.c.l.b16 %v37
  %v118 = vunpack.c.l.b16 %v38
  %v119 = vunpack.c.l.b16 %v39
  %v120 = vunpack.c.l.b16 %v40
  %v121 = vunpack.c.l.b16 %v41
  %v122 = vunpack.c.l.b16 %v42
  %v123 = vunpack.c.l.b16 %v43
  %v124 = vunpack.c.l.b16 %v44
  %v125 = vunpack.c.l.b16 %v45
  %v126 = vunpack.c.l.b16 %v46
  %v127 = vunpack.c.l.b16 %v47
  %v128 = vunpack.c.l.b16 %v48
  %v129 = vpack.c.b16 %v98, %v97
  %v130 = vpack.c.b16 %v100, %v99
  %v131 = vpack.c.b16 %v102, %v101
  %v132 = vpack.c.b16 %v104, %v103
  %v133 = vpack.c.b16 %v106, %v105
  %v134 = vpack.c.b16 %v108, %v107
  %v135 = vpack.c.b16 %v110, %v109
  %v136 = vpack.c.b16 %v112, %v111
  %v137 = vpack.c.b16 %v114, %v113
  %v138 = vpack.c.b16 %v116, %v115
  %v139 = vpack.c.b16 %v118, %v117
  %v140 = vpack.c.b16 %v120, %v119
  %v141 = vpack.c.b16 %v122, %v121
  %v142 = vpack.c.b16 %v124, %v123
  %v143 = vpack.c.b16 %v126, %v125
  %v144 = vpack.c.b16 %v128, %v127
  %161 = vmatprep.subr.bf16.mxu0 0
  %162 = vmatpush1.bf16.msra.mxu0 %v129
  %163 = vmatprep.subr.bf16.mxu0 0
  %164 = vmatpush1.bf16.msra.mxu0 %v130
  %165 = vmatprep.subr.bf16.mxu0 0
  %166 = vmatpush1.bf16.msra.mxu0 %v131
  %167 = vmatprep.subr.bf16.mxu0 0
  %168 = vmatpush1.bf16.msra.mxu0 %v132
  %169 = vmatprep.subr.bf16.mxu0 0
  %170 = vmatpush1.bf16.msra.mxu0 %v133
  %171 = vmatprep.subr.bf16.mxu0 0
  %172 = vmatpush1.bf16.msra.mxu0 %v134
  %173 = vmatprep.subr.bf16.mxu0 0
  %174 = vmatpush1.bf16.msra.mxu0 %v135
  %175 = vmatprep.subr.bf16.mxu0 0
  %176 = vmatpush1.bf16.msra.mxu0 %v136
  %177 = vmatprep.subr.bf16.mxu0 0
  %178 = vmatpush1.bf16.msra.mxu0 %v137
  %179 = vmatprep.subr.bf16.mxu0 0
  %180 = vmatpush1.bf16.msra.mxu0 %v138
  %181 = vmatprep.subr.bf16.mxu0 0
  %182 = vmatpush1.bf16.msra.mxu0 %v139
  %183 = vmatprep.subr.bf16.mxu0 0
  %184 = vmatpush1.bf16.msra.mxu0 %v140
  %185 = vmatprep.subr.bf16.mxu0 0
  %186 = vmatpush1.bf16.msra.mxu0 %v141
  %187 = vmatprep.subr.bf16.mxu0 0
  %188 = vmatpush1.bf16.msra.mxu0 %v142
  %189 = vmatprep.subr.bf16.mxu0 0
  %190 = vmatpush1.bf16.msra.mxu0 %v143
  %191 = vmatprep.subr.bf16.mxu0 0
  %192 = vmatpush1.bf16.msra.mxu0 %v144
  %193 = vmatprep.mubr.bf16.mxu0 %v62
  %194 = vmatmul.mubr.bf16.gmra.mrb[0].mxu0 %v61
  %v195 = vpop.f32.mrb[0].mxu0
  %v196 = vadd.f32 %v54, %v195
  %v197 = vpop.f32.mrb[0].mxu0
  %v198 = vpop.f32.mrb[0].mxu0
  %v199 = vadd.f32 %v54, %v198
  %v200 = vpop.f32.mrb[0].mxu0
  %201 = vdwg.mxu0
  %vm202 = vcmp.gt.f32.partialorder %v196, 0.0
  %vm203 = vcmp.gt.f32.partialorder %v199, 0.0
  %v204 = vlaneseq
  %v205 = vshrl.u32 %v204, 7
  %v206 = vsub.s32 0, %v205
  %v207 = vrot.slane %v50, %v206
  %v208 = vmul.f32 %v207, %v196
  %v209 = vmul.f32 %v207, %v199
  %v210 = vsel %vm202, %v196, %v208
  %v211 = vsel %vm203, %v199, %v209
  %v212 = vpack.c.bf16 %v211, %v210
  %v214 = vunpack.c.l.b16 %v212
  %v215 = vunpack.c.h.b16 %v212
  %v216 = vpack.c.b16 %v214, %v214
  %v217 = vpack.c.b16 %v215, %v215
  %220 = vst [vmem:[%s3] sm:$0xf] %v216
  %221 = vst [vmem:[%s3 + $0x4] sm:$0xf] %v217
  // Predicated region
  $region14: #{fully_auto_forward.10} parent=0 // pred_check
    _
  $region15: #{fully_auto_forward.10} parent=0 // pred_check_branch
    %223 = sbr.rel (0) target = $region17
  $region16: #{fully_auto_forward.10} parent=0 // pred_region
    _
  $region17: #{fully_auto_forward.10} parent=0 // pred_fallthru
    _
  // Predicated region
  $region18: #{fully_auto_forward.10} parent=0 // pred_check
    _
  $region19: #{fully_auto_forward.10} parent=0 // pred_check_branch
    %225 = sbr.rel (0) target = $region21
  $region20: #{fully_auto_forward.10} parent=0 // pred_region
    _
  $region21: #{fully_auto_forward.10} parent=0 // pred_fallthru
    _

// kernel: fully_auto_forward.13
$region0: #{fully_auto_forward.13}
  #allocation0 [shape = 'u32[]', space=smem, size = 0x4, offset = 0x4, fixed_abs, tag = 'smem constant byte address 0x4 - core index']
  #allocation1 [shape = 'u32[144,128]{1,0:T(1,128)}', space=vmem, size = 0x12000, scoped, tag = 'internal scratch']
  %s0 = inlined_call_operand.vmem [shape: bf16[16,128], index: 0, kind: input, shape index: {}]
  %s1 = inlined_call_operand.vmem [shape: bf16[128,128], index: 1, kind: input, shape index: {}]
  %s2 = inlined_call_operand.vmem [shape: f32[2,128], index: 2, kind: input, shape index: {}]
  %s3 = inlined_call_operand.vmem [shape: f32[16,128], index: 3, kind: output, shape index: {}]
  %s4 = sld [smem:[#allocation0]]
  $region22: #{fully_auto_forward.13} parent=0
    _
  %s6 = ssub.s32 1, %s4
  %s7 = scalar_select 0, %s6, %s4
  // Predicated region
  $region2: #{fully_auto_forward.13} parent=0 // pred_check
    _
  $region3: #{fully_auto_forward.13} parent=0 // pred_check_branch
    %9 = sbr.rel (0) target = $region5
  $region4: #{fully_auto_forward.13} parent=0 // pred_region
    _
  $region5: #{fully_auto_forward.13} parent=0 // pred_fallthru
    _
  // Predicated region
  $region6: #{fully_auto_forward.13} parent=0 // pred_check
    _
  $region7: #{fully_auto_forward.13} parent=0 // pred_check_branch
    %11 = sbr.rel (0) target = $region9
  $region8: #{fully_auto_forward.13} parent=0 // pred_region
    _
  $region9: #{fully_auto_forward.13} parent=0 // pred_fallthru
    _
  // Predicated region
  $region10: #{fully_auto_forward.13} parent=0 // pred_check
    _
  $region11: #{fully_auto_forward.13} parent=0 // pred_check_branch
    %13 = sbr.rel (0) target = $region13
  $region12: #{fully_auto_forward.13} parent=0 // pred_region
    _
  $region13: #{fully_auto_forward.13} parent=0 // pred_fallthru
    _
  %v15 = vld [vmem:[%s0] sm:$0xf]
  %v16 = vld [vmem:[%s0 + $0x4] sm:$0xf]
  %v17 = vld [vmem:[%s1] sm:$0xf]
  %v18 = vld [vmem:[%s1 + $0x4] sm:$0xf]
  %v19 = vld [vmem:[%s1 + $0x8] sm:$0xf]
  %v20 = vld [vmem:[%s1 + $0xc] sm:$0xf]
  %v21 = vld [vmem:[%s1 + $0x10] sm:$0xf]
  %v22 = vld [vmem:[%s1 + $0x14] sm:$0xf]
  %v23 = vld [vmem:[%s1 + $0x18] sm:$0xf]
  %v24 = vld [vmem:[%s1 + $0x1c] sm:$0xf]
  %v25 = vld [vmem:[%s1 + $0x20] sm:$0xf]
  %v26 = vld [vmem:[%s1 + $0x24] sm:$0xf]
  %v27 = vld [vmem:[%s1 + $0x28] sm:$0xf]
  %v28 = vld [vmem:[%s1 + $0x2c] sm:$0xf]
  %v29 = vld [vmem:[%s1 + $0x30] sm:$0xf]
  %v30 = vld [vmem:[%s1 + $0x34] sm:$0xf]
  %v31 = vld [vmem:[%s1 + $0x38] sm:$0xf]
  %v32 = vld [vmem:[%s1 + $0x3c] sm:$0xf]
  %v33 = vld [vmem:[%s2] sm:$0x1]
  %v34 = vld [vmem:[%s2 + $0x1] sm:$0x1]
  %v35 = vlaneseq
  %v36 = vshrl.u32 %v35, 7
  %v37 = vsub.s32 0, %v36
  %v38 = vrot.slane %v33, %v37
  %v41 = vunpack.c.l.b16 %v15
  %v42 = vunpack.c.l.b16 %v16
  %v43 = vpack.c.b16 %v42, %v41
  %v61 = vunpack.c.l.b16 %v17
  %v62 = vunpack.c.l.b16 %v18
  %v63 = vunpack.c.l.b16 %v19
  %v64 = vunpack.c.l.b16 %v20
  %v65 = vunpack.c.l.b16 %v21
  %v66 = vunpack.c.l.b16 %v22
  %v67 = vunpack.c.l.b16 %v23
  %v68 = vunpack.c.l.b16 %v24
  %v69 = vunpack.c.l.b16 %v25
  %v70 = vunpack.c.l.b16 %v26
  %v71 = vunpack.c.l.b16 %v27
  %v72 = vunpack.c.l.b16 %v28
  %v73 = vunpack.c.l.b16 %v29
  %v74 = vunpack.c.l.b16 %v30
  %v75 = vunpack.c.l.b16 %v31
  %v76 = vunpack.c.l.b16 %v32
  %v77 = vpack.c.b16 %v62, %v61
  %v78 = vpack.c.b16 %v64, %v63
  %v79 = vpack.c.b16 %v66, %v65
  %v80 = vpack.c.b16 %v68, %v67
  %v81 = vpack.c.b16 %v70, %v69
  %v82 = vpack.c.b16 %v72, %v71
  %v83 = vpack.c.b16 %v74, %v73
  %v84 = vpack.c.b16 %v76, %v75
  %93 = vmatprep.subr.bf16.mxu0 0
  %94 = vmatpush1.bf16.msra.mxu0 %v77
  %95 = vmatprep.subr.bf16.mxu0 0
  %96 = vmatpush1.bf16.msra.mxu0 %v78
  %97 = vmatprep.subr.bf16.mxu0 0
  %98 = vmatpush1.bf16.msra.mxu0 %v79
  %99 = vmatprep.subr.bf16.mxu0 0
  %100 = vmatpush1.bf16.msra.mxu0 %v80
  %101 = vmatprep.subr.bf16.mxu0 0
  %102 = vmatpush1.bf16.msra.mxu0 %v81
  %103 = vmatprep.subr.bf16.mxu0 0
  %104 = vmatpush1.bf16.msra.mxu0 %v82
  %105 = vmatprep.subr.bf16.mxu0 0
  %106 = vmatpush1.bf16.msra.mxu0 %v83
  %107 = vmatprep.subr.bf16.mxu0 0
  %108 = vmatpush1.bf16.msra.mxu0 %v84
  %109 = vmatprep.subr.bf16.mxu0 0
  %110 = vmatpush1.bf16.msra.mxu0 0
  %111 = vmatprep.subr.bf16.mxu0 0
  %112 = vmatpush1.bf16.msra.mxu0 0
  %113 = vmatprep.subr.bf16.mxu0 0
  %114 = vmatpush1.bf16.msra.mxu0 0
  %115 = vmatprep.subr.bf16.mxu0 0
  %116 = vmatpush1.bf16.msra.mxu0 0
  %117 = vmatprep.subr.bf16.mxu0 0
  %118 = vmatpush1.bf16.msra.mxu0 0
  %119 = vmatprep.subr.bf16.mxu0 0
  %120 = vmatpush1.bf16.msra.mxu0 0
  %121 = vmatprep.subr.bf16.mxu0 0
  %122 = vmatpush1.bf16.msra.mxu0 0
  %123 = vmatprep.subr.bf16.mxu0 0
  %124 = vmatpush1.bf16.msra.mxu0 0
  %125 = vmatprep.mubr.bf16.mxu0 0
  %126 = vmatmul.mubr.bf16.gmra.mrb[0].mxu0 %v43
  %v127 = vpop.f32.mrb[0].mxu0
  %v128 = vadd.f32 %v38, %v127
  %v129 = vpop.f32.mrb[0].mxu0
  %v130 = vpop.f32.mrb[0].mxu0
  %v131 = vadd.f32 %v38, %v130
  %v132 = vpop.f32.mrb[0].mxu0
  %133 = vdwg.mxu0
  %vm134 = vcmp.gt.f32.partialorder %v128, 0.0
  %vm135 = vcmp.gt.f32.partialorder %v131, 0.0
  %v136 = vlaneseq
  %v137 = vshrl.u32 %v136, 7
  %v138 = vsub.s32 0, %v137
  %v139 = vrot.slane %v34, %v138
  %v140 = vmul.f32 %v139, %v128
  %v141 = vmul.f32 %v139, %v131
  %v142 = vsel %vm134, %v128, %v140
  %v143 = vsel %vm135, %v131, %v141
  %144 = vst [vmem:[%s3] sm:$0xff] %v142
  %145 = vst [vmem:[%s3 + $0x8] sm:$0xff] %v143
  // Predicated region
  $region14: #{fully_auto_forward.13} parent=0 // pred_check
    _
  $region15: #{fully_auto_forward.13} parent=0 // pred_check_branch
    %147 = sbr.rel (0) target = $region17
  $region16: #{fully_auto_forward.13} parent=0 // pred_region
    _
  $region17: #{fully_auto_forward.13} parent=0 // pred_fallthru
    _
  // Predicated region
  $region18: #{fully_auto_forward.13} parent=0 // pred_check
    _
  $region19: #{fully_auto_forward.13} parent=0 // pred_check_branch
    %149 = sbr.rel (0) target = $region21
  $region20: #{fully_auto_forward.13} parent=0 // pred_region
    _
  $region21: #{fully_auto_forward.13} parent=0 // pred_fallthru
    _

// kernel: fully_auto_forward.17
$region0: #{fully_auto_forward.17}
  #allocation0 [shape = 'u32[]', space=smem, size = 0x4, offset = 0x4, fixed_abs, tag = 'smem constant byte address 0x4 - core index']
  #allocation1 [shape = 'u32[144,128]{1,0:T(1,128)}', space=vmem, size = 0x12000, scoped, tag = 'internal scratch']
  %s0 = inlined_call_operand.vmem [shape: bf16[16,128], index: 0, kind: input, shape index: {}]
  %s1 = inlined_call_operand.vmem [shape: bf16[128,256], index: 1, kind: input, shape index: {}]
  %s2 = inlined_call_operand.vmem [shape: f32[2,256], index: 2, kind: input, shape index: {}]
  %s3 = inlined_call_operand.vmem [shape: f32[16,256], index: 3, kind: output, shape index: {}]
  %s4 = sld [smem:[#allocation0]]
  $region22: #{fully_auto_forward.17} parent=0
    _
  %s6 = ssub.s32 1, %s4
  %s7 = scalar_select 0, %s6, %s4
  // Predicated region
  $region2: #{fully_auto_forward.17} parent=0 // pred_check
    _
  $region3: #{fully_auto_forward.17} parent=0 // pred_check_branch
    %9 = sbr.rel (0) target = $region5
  $region4: #{fully_auto_forward.17} parent=0 // pred_region
    _
  $region5: #{fully_auto_forward.17} parent=0 // pred_fallthru
    _
  // Predicated region
  $region6: #{fully_auto_forward.17} parent=0 // pred_check
    _
  $region7: #{fully_auto_forward.17} parent=0 // pred_check_branch
    %11 = sbr.rel (0) target = $region9
  $region8: #{fully_auto_forward.17} parent=0 // pred_region
    _
  $region9: #{fully_auto_forward.17} parent=0 // pred_fallthru
    _
  // Predicated region
  $region10: #{fully_auto_forward.17} parent=0 // pred_check
    _
  $region11: #{fully_auto_forward.17} parent=0 // pred_check_branch
    %13 = sbr.rel (0) target = $region13
  $region12: #{fully_auto_forward.17} parent=0 // pred_region
    _
  $region13: #{fully_auto_forward.17} parent=0 // pred_fallthru
    _
  %v15 = vld [vmem:[%s0] sm:$0xf]
  %v16 = vld [vmem:[%s0 + $0x4] sm:$0xf]
  %v17 = vld [vmem:[%s1] sm:$0xff]
  %v18 = vld [vmem:[%s1 + $0x8] sm:$0xff]
  %v19 = vld [vmem:[%s1 + $0x10] sm:$0xff]
  %v20 = vld [vmem:[%s1 + $0x18] sm:$0xff]
  %v21 = vld [vmem:[%s1 + $0x20] sm:$0xff]
  %v22 = vld [vmem:[%s1 + $0x28] sm:$0xff]
  %v23 = vld [vmem:[%s1 + $0x30] sm:$0xff]
  %v24 = vld [vmem:[%s1 + $0x38] sm:$0xff]
  %v25 = vld [vmem:[%s1 + $0x40] sm:$0xff]
  %v26 = vld [vmem:[%s1 + $0x48] sm:$0xff]
  %v27 = vld [vmem:[%s1 + $0x50] sm:$0xff]
  %v28 = vld [vmem:[%s1 + $0x58] sm:$0xff]
  %v29 = vld [vmem:[%s1 + $0x60] sm:$0xff]
  %v30 = vld [vmem:[%s1 + $0x68] sm:$0xff]
  %v31 = vld [vmem:[%s1 + $0x70] sm:$0xff]
  %v32 = vld [vmem:[%s1 + $0x78] sm:$0xff]
  %v33 = vld [vmem:[%s2] ss:$2 sm:$0x3]
  %s34 = scalar_lea.vmem %s2, 1
  %v35 = vld [vmem:[%s34] ss:$2 sm:$0x3]
  %v37 = vlaneseq
  %v38 = vshrl.u32 %v37, 7
  %v39 = vsub.s32 0, %v38
  %v40 = vrot.slane %v33, %v39
  %v41 = vlaneseq
  %v42 = vshrl.u32 %v41, 7
  %v43 = vsub.s32 1, %v42
  %v44 = vrot.slane %v33, %v43
  %v49 = vunpack.c.l.b16 %v15
  %v50 = vunpack.c.l.b16 %v16
  %v51 = vpack.c.b16 %v50, %v49
  %v69 = vunpack.c.l.b16 %v17
  %v70 = vunpack.c.h.b16 %v17
  %v71 = vunpack.c.l.b16 %v18
  %v72 = vunpack.c.h.b16 %v18
  %v73 = vunpack.c.l.b16 %v19
  %v74 = vunpack.c.h.b16 %v19
  %v75 = vunpack.c.l.b16 %v20
  %v76 = vunpack.c.h.b16 %v20
  %v77 = vunpack.c.l.b16 %v21
  %v78 = vunpack.c.h.b16 %v21
  %v79 = vunpack.c.l.b16 %v22
  %v80 = vunpack.c.h.b16 %v22
  %v81 = vunpack.c.l.b16 %v23
  %v82 = vunpack.c.h.b16 %v23
  %v83 = vunpack.c.l.b16 %v24
  %v84 = vunpack.c.h.b16 %v24
  %v85 = vunpack.c.l.b16 %v25
  %v86 = vunpack.c.h.b16 %v25
  %v87 = vunpack.c.l.b16 %v26
  %v88 = vunpack.c.h.b16 %v26
  %v89 = vunpack.c.l.b16 %v27
  %v90 = vunpack.c.h.b16 %v27
  %v91 = vunpack.c.l.b16 %v28
  %v92 = vunpack.c.h.b16 %v28
  %v93 = vunpack.c.l.b16 %v29
  %v94 = vunpack.c.h.b16 %v29
  %v95 = vunpack.c.l.b16 %v30
  %v96 = vunpack.c.h.b16 %v30
  %v97 = vunpack.c.l.b16 %v31
  %v98 = vunpack.c.h.b16 %v31
  %v99 = vunpack.c.l.b16 %v32
  %v100 = vunpack.c.h.b16 %v32
  %v101 = vpack.c.b16 %v71, %v69
  %v102 = vpack.c.b16 %v72, %v70
  %v103 = vpack.c.b16 %v75, %v73
  %v104 = vpack.c.b16 %v76, %v74
  %v105 = vpack.c.b16 %v79, %v77
  %v106 = vpack.c.b16 %v80, %v78
  %v107 = vpack.c.b16 %v83, %v81
  %v108 = vpack.c.b16 %v84, %v82
  %v109 = vpack.c.b16 %v87, %v85
  %v110 = vpack.c.b16 %v88, %v86
  %v111 = vpack.c.b16 %v91, %v89
  %v112 = vpack.c.b16 %v92, %v90
  %v113 = vpack.c.b16 %v95, %v93
  %v114 = vpack.c.b16 %v96, %v94
  %v115 = vpack.c.b16 %v99, %v97
  %v116 = vpack.c.b16 %v100, %v98
  %133 = vmatprep.subr.bf16.mxu0 %v102
  %134 = vmatpush1.bf16.msra.mxu0 %v101
  %135 = vmatprep.subr.bf16.mxu0 %v104
  %136 = vmatpush1.bf16.msra.mxu0 %v103
  %137 = vmatprep.subr.bf16.mxu0 %v106
  %138 = vmatpush1.bf16.msra.mxu0 %v105
  %139 = vmatprep.subr.bf16.mxu0 %v108
  %140 = vmatpush1.bf16.msra.mxu0 %v107
  %141 = vmatprep.subr.bf16.mxu0 %v110
  %142 = vmatpush1.bf16.msra.mxu0 %v109
  %143 = vmatprep.subr.bf16.mxu0 %v112
  %144 = vmatpush1.bf16.msra.mxu0 %v111
  %145 = vmatprep.subr.bf16.mxu0 %v114
  %146 = vmatpush1.bf16.msra.mxu0 %v113
  %147 = vmatprep.subr.bf16.mxu0 %v116
  %148 = vmatpush1.bf16.msra.mxu0 %v115
  %149 = vmatprep.subr.bf16.mxu0 0
  %150 = vmatpush1.bf16.msra.mxu0 0
  %151 = vmatprep.subr.bf16.mxu0 0
  %152 = vmatpush1.bf16.msra.mxu0 0
  %153 = vmatprep.subr.bf16.mxu0 0
  %154 = vmatpush1.bf16.msra.mxu0 0
  %155 = vmatprep.subr.bf16.mxu0 0
  %156 = vmatpush1.bf16.msra.mxu0 0
  %157 = vmatprep.subr.bf16.mxu0 0
  %158 = vmatpush1.bf16.msra.mxu0 0
  %159 = vmatprep.subr.bf16.mxu0 0
  %160 = vmatpush1.bf16.msra.mxu0 0
  %161 = vmatprep.subr.bf16.mxu0 0
  %162 = vmatpush1.bf16.msra.mxu0 0
  %163 = vmatprep.subr.bf16.mxu0 0
  %164 = vmatpush1.bf16.msra.mxu0 0
  %165 = vmatprep.mubr.bf16.mxu0 0
  %166 = vmatmul.mubr.bf16.gmra.mrb[0].mxu0 %v51
  %v167 = vpop.f32.mrb[0].mxu0
  %v168 = vadd.f32 %v40, %v167
  %v169 = vpop.f32.mrb[0].mxu0
  %v170 = vadd.f32 %v44, %v169
  %v171 = vpop.f32.mrb[0].mxu0
  %v172 = vadd.f32 %v40, %v171
  %v173 = vpop.f32.mrb[0].mxu0
  %v174 = vadd.f32 %v44, %v173
  %175 = vdwg.mxu0
  %vm176 = vcmp.gt.f32.partialorder %v168, 0.0
  %vm177 = vcmp.gt.f32.partialorder %v170, 0.0
  %vm178 = vcmp.gt.f32.partialorder %v172, 0.0
  %vm179 = vcmp.gt.f32.partialorder %v174, 0.0
  %v181 = vlaneseq
  %v182 = vshrl.u32 %v181, 7
  %v183 = vsub.s32 0, %v182
  %v184 = vrot.slane %v35, %v183
  %v185 = vlaneseq
  %v186 = vshrl.u32 %v185, 7
  %v187 = vsub.s32 1, %v186
  %v188 = vrot.slane %v35, %v187
  %v191 = vmul.f32 %v184, %v168
  %v192 = vmul.f32 %v188, %v170
  %v193 = vmul.f32 %v184, %v172
  %v194 = vmul.f32 %v188, %v174
  %v195 = vsel %vm176, %v168, %v191
  %v196 = vsel %vm177, %v170, %v192
  %v197 = vsel %vm178, %v172, %v193
  %v198 = vsel %vm179, %v174, %v194
  %199 = vst [vmem:[%s3] sm:$0xff] %v195
  %200 = vst [vmem:[%s3 + $0x8] sm:$0xff] %v196
  %201 = vst [vmem:[%s3 + $0x10] sm:$0xff] %v197
  %202 = vst [vmem:[%s3 + $0x18] sm:$0xff] %v198
  // Predicated region
  $region14: #{fully_auto_forward.17} parent=0 // pred_check
    _
  $region15: #{fully_auto_forward.17} parent=0 // pred_check_branch
    %204 = sbr.rel (0) target = $region17
  $region16: #{fully_auto_forward.17} parent=0 // pred_region
    _
  $region17: #{fully_auto_forward.17} parent=0 // pred_fallthru
    _
  // Predicated region
  $region18: #{fully_auto_forward.17} parent=0 // pred_check
    _
  $region19: #{fully_auto_forward.17} parent=0 // pred_check_branch
    %206 = sbr.rel (0) target = $region21
  $region20: #{fully_auto_forward.17} parent=0 // pred_region
    _
  $region21: #{fully_auto_forward.17} parent=0 // pred_fallthru
    _

</llo_original>
